<compile_context>
chip_gen: v7x
topology: tpu7x:2x2x1
jax: 0.10.0
libtpu: 0.0.40
codegen_flags: <defaults>
</compile_context>

<pallas_src>
import functools

import jax
import jax.numpy as jnp
from jax.experimental import pallas as pl
from jax.experimental.pallas import tpu as pltpu


def _round_up(x: int, m: int) -> int:
    return (x + m - 1) // m * m


def _pick_block_m(M: int, block_m: int) -> int:
    """Largest M-tile <= block_m, multiple of 8; prefer one dividing M exactly."""
    cap = min(block_m, _round_up(M, 8))
    cap -= cap % 8
    cap = max(cap, 8)
    if M % 8 == 0:
        for tm in range(cap, 7, -8):
            if M % tm == 0:
                if 2 * tm >= cap:      # don't shrink tiles below half the budget
                    return tm
                break
    return cap


def _patch_embed_kernel(patches_ref, w_ref, b_ref, o_ref):
    # patches_ref: (TM, K) compute dtype; w_ref: (K, Np) compute dtype
    # b_ref: (1, Np) float32; o_ref: (TM, Np) out dtype
    acc = jnp.dot(
        patches_ref[...], w_ref[...], preferred_element_type=jnp.float32
    )
    o_ref[...] = (acc + b_ref[...]).astype(o_ref.dtype)


def patch_embed_forward(
    x_nchw: jax.Array,
    weight: jax.Array,          # (embed_dim, in_chans, KH, KW) -- PyTorch conv layout
    bias: jax.Array,            # (embed_dim,)
    *,
    kernel_size=(7, 7),
    stride=(4, 4),
    padding=(3, 3),
    compute_dtype=None,         # None -> follow input dtype (exact); jnp.bfloat16 for fast path
    out_dtype=None,             # None -> follow input dtype; jnp.bfloat16 halves writeback
    block_m: int = 2048,        # M tile budget; multiple of 8
) -> jax.Array:
    B, C, H, W = x_nchw.shape
    KH, KW = kernel_size
    SH, SW = stride
    PH, PW = padding
    embed_dim = weight.shape[0]

    Hout = (H + 2 * PH - KH) // SH + 1
    Wout = (W + 2 * PW - KW) // SW + 1
    M = B * Hout * Wout
    K = KH * KW * C

    if compute_dtype is None:
        compute_dtype = x_nchw.dtype
    if out_dtype is None:
        out_dtype = x_nchw.dtype

    # ---- glue: cast FIRST, then NCHW -> NHWC, zero-pad, im2col via static
    # strided slices (XLA emits copies, not a 6-D gather).  K order = (kh, kw, c).
    x = x_nchw.astype(compute_dtype)
    x_nhwc = jnp.transpose(x, (0, 2, 3, 1))
    x_pad = jnp.pad(x_nhwc, ((0, 0), (PH, PH), (PW, PW), (0, 0)))
    slabs = []
    for kh in range(KH):
        for kw in range(KW):
            slabs.append(
                x_pad[:,
                      kh:kh + (Hout - 1) * SH + 1:SH,
                      kw:kw + (Wout - 1) * SW + 1:SW,
                      :]
            )  # (B, Hout, Wout, C)
    patches = jnp.stack(slabs, axis=3).reshape(M, K)          # (M, K) compute dtype

    # Conv weight (N, C, KH, KW) -> (KH, KW, C, N) -> (K, N): same K ordering.
    w_mat = jnp.transpose(weight, (2, 3, 1, 0)).reshape(K, embed_dim)
    w_mat = w_mat.astype(compute_dtype)
    b_mat = bias.reshape(1, embed_dim).astype(jnp.float32)

    # Lane-dense pad only on the small N axis (zero pads don't change the matmul).
    Np = _round_up(embed_dim, 128)
    if Np != embed_dim:
        w_mat = jnp.pad(w_mat, ((0, 0), (0, Np - embed_dim)))
        b_mat = jnp.pad(b_mat, ((0, 0), (0, Np - embed_dim)))

    # ---- M tiling (double-buffered, "parallel" grid axis).
    TM = _pick_block_m(M, block_m)
    Mp = _round_up(M, TM)
    if Mp != M:
        patches = jnp.pad(patches, ((0, Mp - M), (0, 0)))
    grid_m = Mp // TM

    # VMEM budget derived from actual tile sizes (double-buffered ins/outs +
    # resident weight/bias), clamped to v7x's 64 MiB physical VMEM.
    cbytes = jnp.dtype(compute_dtype).itemsize
    obytes = jnp.dtype(out_dtype).itemsize
    est_bytes = (2 * TM * K * cbytes            # patch tile (x2 buffers)
                 + 2 * TM * Np * obytes         # output tile (x2 buffers)
                 + 2 * K * Np * cbytes          # weight
                 + 2 * Np * 4)                  # bias
    vmem_limit = int(min(max(2 * est_bytes + (4 << 20), 32 << 20), 64 << 20))

    out = pl.pallas_call(
        _patch_embed_kernel,
        out_shape=jax.ShapeDtypeStruct((Mp, Np), out_dtype),
        grid_spec=pltpu.PrefetchScalarGridSpec(
            num_scalar_prefetch=0,
            grid=(grid_m,),
            in_specs=[
                pl.BlockSpec((TM, K), lambda i: (i, 0)),    # patch tile, streamed
                pl.BlockSpec((K, Np), lambda i: (0, 0)),    # weight, VMEM-resident
                pl.BlockSpec((1, Np), lambda i: (0, 0)),    # bias, VMEM-resident
            ],
            out_specs=pl.BlockSpec((TM, Np), lambda i: (i, 0)),
        ),
        compiler_params=pltpu.CompilerParams(
            dimension_semantics=("parallel",),
            vmem_limit_bytes=vmem_limit,
        ),
    )(patches, w_mat, b_mat)

    out = out[:M, :embed_dim]   # identity when TM | M and embed_dim % 128 == 0
    # (M, N) -> (B, Hout, Wout, embed_dim)  ==  PyTorch's permute(0, 2, 3, 1)
    return out.reshape(B, Hout, Wout, embed_dim)


if __name__ == "__main__":
    # Small deterministic example consistent with the module:
    # batch=2, in_chans=3, H=W=16, kernel=7, stride=4, padding=3, embed_dim=128
    B, C, H, W = 2, 3, 16, 16
    embed_dim = 128
    kernel_size, stride, padding = (7, 7), (4, 4), (3, 3)

    key = jax.random.PRNGKey(0)
    kx, kw_, kb = jax.random.split(key, 3)

    x = jax.random.normal(kx, (B, C, H, W), dtype=jnp.float32)
    fan_in = C * kernel_size[0] * kernel_size[1]
    bound = 1.0 / (fan_in ** 0.5)
    weight = jax.random.uniform(
        kw_, (embed_dim, C, kernel_size[0], kernel_size[1]),
        minval=-bound, maxval=bound, dtype=jnp.float32,
    )
    bias = jax.random.uniform(
        kb, (embed_dim,), minval=-bound, maxval=bound, dtype=jnp.float32
    )

    # Plain-JAX conv reference (PyTorch forward semantics).
    ref = jax.lax.conv_general_dilated(
        x, weight,
        window_strides=stride,
        padding=[(padding[0], padding[0]), (padding[1], padding[1])],
        dimension_numbers=("NCHW", "OIHW", "NCHW"),
    ) + bias[None, :, None, None]
    ref = jnp.transpose(ref, (0, 2, 3, 1))

    # 1) default path: compute/out dtypes follow the input (exact f32 semantics).
    fwd_f32 = jax.jit(functools.partial(
        patch_embed_forward, kernel_size=kernel_size, stride=stride,
        padding=padding))
    out_f32 = fwd_f32(x, weight, bias)
    jax.block_until_ready(out_f32)
    assert out_f32.shape == ref.shape == (B, 4, 4, embed_dim), out_f32.shape
    assert jnp.allclose(out_f32, ref, atol=1e-4, rtol=1e-4)

    # 2) bandwidth-optimized path: bf16 operands (f32 MXU accumulation + f32
    #    bias add) and bf16 output; looser tolerance.
    fwd_bf16 = jax.jit(functools.partial(
        patch_embed_forward, kernel_size=kernel_size, stride=stride,
        padding=padding, compute_dtype=jnp.bfloat16, out_dtype=jnp.bfloat16))
    out_bf16 = fwd_bf16(x, weight, bias)
    jax.block_until_ready(out_bf16)
    assert out_bf16.shape == ref.shape and out_bf16.dtype == jnp.bfloat16
    assert jnp.allclose(out_bf16.astype(jnp.float32), ref, atol=5e-2, rtol=5e-2)

    print("KERNEL_OK")
</pallas_src>

<mosaic_0001>
module attributes {stable_mosaic.version = 11 : i64} {
  func.func @_patch_embed_kernel(%arg0: i32, %arg1: memref<32x147xf32, #tpu.memory_space<vmem>>, %arg2: memref<147x128xf32, #tpu.memory_space<vmem>>, %arg3: memref<1x128xf32, #tpu.memory_space<vmem>>, %arg4: memref<32x128xf32, #tpu.memory_space<vmem>>) attributes {dimension_semantics = [#tpu.dimension_semantics<parallel>], iteration_bounds = array<i64: 1>, scalar_prefetch = 0 : i64, scratch_operands = 0 : i64, tpu.core_type = #tpu.core_type<tc>, window_params = [{transform_indices = @transform_0, window_bounds = array<i64: 32, 147>}, {pipeline_mode = #tpu.pipeline_mode<synchronous>, transform_indices = @transform_1, window_bounds = array<i64: 147, 128>}, {pipeline_mode = #tpu.pipeline_mode<synchronous>, transform_indices = @transform_2, window_bounds = array<i64: 1, 128>}, {transform_indices = @transform_3, window_bounds = array<i64: 32, 128>}]} {
    %c0 = arith.constant 0 : index
    %c0_0 = arith.constant 0 : index
    %0 = vector.load %arg1[%c0, %c0_0] : memref<32x147xf32, #tpu.memory_space<vmem>>, vector<32x147xf32>
    %c0_1 = arith.constant 0 : index
    %c0_2 = arith.constant 0 : index
    %1 = vector.load %arg2[%c0_1, %c0_2] : memref<147x128xf32, #tpu.memory_space<vmem>>, vector<147x128xf32>
    %cst = arith.constant dense<0.000000e+00> : vector<32x128xf32>
    %2 = tpu.matmul %0, %1, %cst {dimension_numbers = #tpu.dot_dimension_numbers<[1], [0], [0], [1], [0, 0, 1, 1], [], []>} : vector<32x147xf32>, vector<147x128xf32>, vector<32x128xf32> -> vector<32x128xf32>
    %c0_3 = arith.constant 0 : index
    %c0_4 = arith.constant 0 : index
    %3 = vector.load %arg3[%c0_3, %c0_4] : memref<1x128xf32, #tpu.memory_space<vmem>>, vector<1x128xf32>
    %4 = vector.broadcast %3 : vector<1x128xf32> to vector<32x128xf32>
    %5 = arith.addf %2, %4 : vector<32x128xf32>
    %c0_5 = arith.constant 0 : index
    %c0_6 = arith.constant 0 : index
    %6 = vector.load %arg4[%c0_5, %c0_6] : memref<32x128xf32, #tpu.memory_space<vmem>>, vector<32x128xf32>
    tpu.vector_store %arg4[%c0_5, %c0_6], %5 {strides = array<i32>} : memref<32x128xf32, #tpu.memory_space<vmem>>, vector<32x128xf32>,
    return
  }
  func.func @transform_0(%arg0: i32) -> (i32, i32) {
    %c0_i32 = arith.constant 0 : i32
    %c0_i32_0 = arith.constant 0 : i32
    return %arg0, %c0_i32 : i32, i32
  }
  func.func @transform_1(%arg0: i32) -> (i32, i32) {
    %c0_i32 = arith.constant 0 : i32
    %c0_i32_0 = arith.constant 0 : i32
    %c0_i32_1 = arith.constant 0 : i32
    return %c0_i32, %c0_i32_0 : i32, i32
  }
  func.func @transform_2(%arg0: i32) -> (i32, i32) {
    %c0_i32 = arith.constant 0 : i32
    %c0_i32_0 = arith.constant 0 : i32
    %c0_i32_1 = arith.constant 0 : i32
    return %c0_i32, %c0_i32_0 : i32, i32
  }
  func.func @transform_3(%arg0: i32) -> (i32, i32) {
    %c0_i32 = arith.constant 0 : i32
    %c0_i32_0 = arith.constant 0 : i32
    return %arg0, %c0_i32 : i32, i32
  }
}

</mosaic_0001>

<llo_original>
// kernel: patch_embed_forward.1
$region0: #{patch_embed_forward.1}
  #allocation0 [shape = 'u32[]', space=smem, size = 0x4, offset = 0x4, fixed_abs, tag = 'smem constant byte address 0x4 - core index']
  #allocation1 [shape = 'u32[144,128]{1,0:T(1,128)}', space=vmem, size = 0x12000, scoped, tag = 'internal scratch']
  %s0 = inlined_call_operand.vmem [shape: f32[32,147], index: 0, kind: input, shape index: {}]
  %s1 = inlined_call_operand.vmem [shape: f32[147,128], index: 1, kind: input, shape index: {}]
  %s2 = inlined_call_operand.vmem [shape: f32[1,128], index: 2, kind: input, shape index: {}]
  %s3 = inlined_call_operand.hbm [shape: f32[32,128], index: 3, kind: output, shape index: {}]
  %s4 = sld [smem:[#allocation0]]
  $region22: #{patch_embed_forward.1} parent=0
    _
  %s6 = ssub.s32 1, %s4
  %s7 = scalar_select 0, %s6, %s4
  $region1: #{patch_embed_forward.1} parent=0
    #allocation2 [shape = 'u8[16384]{0}', space=vmem, size = 0x4000, scoped, tag = 'output window, operand 0, single buffered']
    #allocation3 [shape = 's32[1]{0}', space=sflag, size = 0x4, scoped, tag = 'scoped memory for patch_embed_forward.1']
    %8 = vsyncpa [#allocation3], 0
    // Predicated region
    $region2: #{patch_embed_forward.1} parent=1 // pred_check
      _
    $region3: #{patch_embed_forward.1} parent=1 // pred_check_branch
      %10 = sbr.rel (0) target = $region5
    $region4: #{patch_embed_forward.1} parent=1 // pred_region
      _
    $region5: #{patch_embed_forward.1} parent=1 // pred_fallthru
      _
    // Predicated region
    $region6: #{patch_embed_forward.1} parent=1 // pred_check
      _
    $region7: #{patch_embed_forward.1} parent=1 // pred_check_branch
      %12 = sbr.rel (0) target = $region9
    $region8: #{patch_embed_forward.1} parent=1 // pred_region
      _
    $region9: #{patch_embed_forward.1} parent=1 // pred_fallthru
      _
    // Predicated region
    $region10: #{patch_embed_forward.1} parent=1 // pred_check
      _
    $region11: #{patch_embed_forward.1} parent=1 // pred_check_branch
      %14 = sbr.rel (0) target = $region13
    $region12: #{patch_embed_forward.1} parent=1 // pred_region
      _
    $region13: #{patch_embed_forward.1} parent=1 // pred_fallthru
      _
    %v15 = vld [vmem:[%s0] sm:$0xff]
    %v16 = vld [vmem:[%s0 + $0x8] sm:$0xff]
    %v17 = vld [vmem:[%s0 + $0x10] sm:$0xff]
    %v18 = vld [vmem:[%s0 + $0x18] sm:$0xff]
    %v19 = vld [vmem:[%s0 + $0x20] sm:$0xff]
    %v20 = vld [vmem:[%s0 + $0x28] sm:$0xff]
    %v21 = vld [vmem:[%s0 + $0x30] sm:$0xff]
    %v22 = vld [vmem:[%s0 + $0x38] sm:$0xff]
    %v23 = vld [vmem:[%s1] sm:$0xff]
    %v24 = vld [vmem:[%s1 + $0x8] sm:$0xff]
    %v25 = vld [vmem:[%s1 + $0x10] sm:$0xff]
    %v26 = vld [vmem:[%s1 + $0x18] sm:$0xff]
    %v27 = vld [vmem:[%s1 + $0x20] sm:$0xff]
    %v28 = vld [vmem:[%s1 + $0x28] sm:$0xff]
    %v29 = vld [vmem:[%s1 + $0x30] sm:$0xff]
    %v30 = vld [vmem:[%s1 + $0x38] sm:$0xff]
    %v31 = vld [vmem:[%s1 + $0x40] sm:$0xff]
    %v32 = vld [vmem:[%s1 + $0x48] sm:$0xff]
    %v33 = vld [vmem:[%s1 + $0x50] sm:$0xff]
    %v34 = vld [vmem:[%s1 + $0x58] sm:$0xff]
    %v35 = vld [vmem:[%s1 + $0x60] sm:$0xff]
    %v36 = vld [vmem:[%s1 + $0x68] sm:$0xff]
    %v37 = vld [vmem:[%s1 + $0x70] sm:$0xff]
    %v38 = vld [vmem:[%s1 + $0x78] sm:$0xff]
    %v39 = vld [vmem:[%s1 + $0x80] sm:$0xff]
    %v40 = vld [vmem:[%s1 + $0x88] sm:$0xff]
    %v41 = vld [vmem:[%s1 + $0x90] sm:$0x7]
    %v42 = vld [vmem:[%s2] sm:$0x1]
    %v44 = vlaneseq
    %v45 = vshrl.u32 %v44, 7
    %v46 = vsub.s32 0, %v45
    %v47 = vrot.slane %v42, %v46
    %vm49 = vcmask 154624
    %v51 = vsel %vm49, %v16, 0
    %v54 = vsel %vm49, %v18, 0
    %v57 = vsel %vm49, %v20, 0
    %v60 = vsel %vm49, %v22, 0
    %vm62 = vcmask 1042432
    %v64 = vsel %vm62, %v41, 0
    %66 = vmatprep.subr.mxu0 0.0
    %67 = vmatpush1.msra.mxu0 %v23
    %68 = vmatprep.subr.mxu0 0.0
    %69 = vmatpush1.msra.mxu0 %v24
    %70 = vmatprep.subr.mxu0 0.0
    %71 = vmatpush1.msra.mxu0 %v25
    %72 = vmatprep.subr.mxu0 0.0
    %73 = vmatpush1.msra.mxu0 %v26
    %74 = vmatprep.subr.mxu0 0.0
    %75 = vmatpush1.msra.mxu0 %v27
    %76 = vmatprep.subr.mxu0 0.0
    %77 = vmatpush1.msra.mxu0 %v28
    %78 = vmatprep.subr.mxu0 0.0
    %79 = vmatpush1.msra.mxu0 %v29
    %80 = vmatprep.subr.mxu0 0.0
    %81 = vmatpush1.msra.mxu0 %v30
    %82 = vmatprep.subr.mxu0 0.0
    %83 = vmatpush1.msra.mxu0 %v31
    %84 = vmatprep.subr.mxu0 0.0
    %85 = vmatpush1.msra.mxu0 %v32
    %86 = vmatprep.subr.mxu0 0.0
    %87 = vmatpush1.msra.mxu0 %v33
    %88 = vmatprep.subr.mxu0 0.0
    %89 = vmatpush1.msra.mxu0 %v34
    %90 = vmatprep.subr.mxu0 0.0
    %91 = vmatpush1.msra.mxu0 %v35
    %92 = vmatprep.subr.mxu0 0.0
    %93 = vmatpush1.msra.mxu0 %v36
    %94 = vmatprep.subr.mxu0 0.0
    %95 = vmatpush1.msra.mxu0 %v37
    %96 = vmatprep.subr.mxu0 0.0
    %97 = vmatpush1.msra.mxu0 %v38
    %98 = vmatprep.subr.mxu0 0.0
    %99 = vmatpush1.msra.mxu0 %v39
    %100 = vmatprep.subr.mxu0 0.0
    %101 = vmatpush1.msra.mxu0 %v40
    %102 = vmatprep.subr.mxu0 0.0
    %103 = vmatpush1.msra.mxu0 %v64
    %104 = vmatprep.subr.mxu0 0.0
    %105 = vmatpush1.msra.mxu0 0.0
    %106 = vmatprep.subr.mxu0 0.0
    %107 = vmatpush1.msra.mxu0 0.0
    %108 = vmatprep.subr.mxu0 0.0
    %109 = vmatpush1.msra.mxu0 0.0
    %110 = vmatprep.subr.mxu0 0.0
    %111 = vmatpush1.msra.mxu0 0.0
    %112 = vmatprep.subr.mxu0 0.0
    %113 = vmatpush1.msra.mxu0 0.0
    %114 = vmatprep.subr.mxu0 0.0
    %115 = vmatpush1.msra.mxu0 0.0
    %116 = vmatprep.subr.mxu0 0.0
    %117 = vmatpush1.msra.mxu0 0.0
    %118 = vmatprep.subr.mxu0 0.0
    %119 = vmatpush1.msra.mxu0 0.0
    %120 = vmatprep.subr.mxu0 0.0
    %121 = vmatpush1.msra.mxu0 0.0
    %122 = vmatprep.subr.mxu0 0.0
    %123 = vmatpush1.msra.mxu0 0.0
    %124 = vmatprep.subr.mxu0 0.0
    %125 = vmatpush1.msra.mxu0 0.0
    %126 = vmatprep.subr.mxu0 0.0
    %127 = vmatpush1.msra.mxu0 0.0
    %128 = vmatprep.subr.mxu0 0.0
    %129 = vmatpush1.msra.mxu0 0.0
    %130 = vmatprep.mubr.f32.mxu0 %v51
    %131 = vmatmul.mubr.f32.gmra.mrb[0].mxu0 %v15
    %v132 = vpop.f32.mrb[0].mxu0
    %v133 = vadd.f32 %v47, %v132
    %v134 = vpop.f32.mrb[0].mxu0
    %135 = vmatprep.mubr.f32.mxu0 %v54
    %136 = vmatmul.mubr.f32.gmra.mrb[0].mxu0 %v17
    %v137 = vpop.f32.mrb[0].mxu0
    %v138 = vadd.f32 %v47, %v137
    %v139 = vpop.f32.mrb[0].mxu0
    %140 = vmatprep.mubr.f32.mxu0 %v57
    %141 = vmatmul.mubr.f32.gmra.mrb[0].mxu0 %v19
    %v142 = vpop.f32.mrb[0].mxu0
    %v143 = vadd.f32 %v47, %v142
    %v144 = vpop.f32.mrb[0].mxu0
    %145 = vmatprep.mubr.f32.mxu0 %v60
    %146 = vmatmul.mubr.f32.gmra.mrb[0].mxu0 %v21
    %v147 = vpop.f32.mrb[0].mxu0
    %v148 = vadd.f32 %v47, %v147
    %v149 = vpop.f32.mrb[0].mxu0
    %150 = vdwg.mxu0
    %151 = vst [vmem:[#allocation2] sm:$0xff] %v133
    %152 = vst [vmem:[#allocation2 + $0x8] sm:$0xff] %v138
    %153 = vst [vmem:[#allocation2 + $0x10] sm:$0xff] %v143
    %154 = vst [vmem:[#allocation2 + $0x18] sm:$0xff] %v148
    // Predicated region
    $region14: #{patch_embed_forward.1} parent=1 // pred_check
      _
    $region15: #{patch_embed_forward.1} parent=1 // pred_check_branch
      %156 = sbr.rel (0) target = $region17
    $region16: #{patch_embed_forward.1} parent=1 // pred_region
      %s158 = ssub.s32 512, 512
      %159 = vsyncadd [#allocation3], %s158
      %s160 = sshll.u32 [#allocation2], 4
      %s161 = int_to_ptr.vmem [resolvable:$true] %s160
      %166 = dma.vmem_to_hbm [thread:$0]  %s161, 512, %s3, [#allocation3], 128, 128, 8
    $region17: #{patch_embed_forward.1} parent=1 // pred_fallthru
      _
    // Predicated region
    $region18: #{patch_embed_forward.1} parent=1 // pred_check
      _
    $region19: #{patch_embed_forward.1} parent=1 // pred_check_branch
      %168 = sbr.rel (0) target = $region21
    $region20: #{patch_embed_forward.1} parent=1 // pred_region
      %169 = dma.done [#allocation3], 512
    $region21: #{patch_embed_forward.1} parent=1 // pred_fallthru
      _
    %170 = vsyncpa [#allocation3], 1

</llo_original>
